<compile_context>
chip_gen: v6e
topology: v6e:2x2x1
jax: 0.10.0
libtpu: 0.0.40
codegen_flags: <defaults>
</compile_context>

<pallas_src>
import jax
import jax.numpy as jnp
from jax.experimental import pallas as pl
from jax.experimental.pallas import tpu as pltpu


def _round_up(v, m):
    return ((v + m - 1) // m) * m


def _tpu_generation_config():
    """Return (vmem_limit_bytes, tm, tn, tk) chosen per TPU generation."""
    kind = ""
    try:
        kind = jax.devices()[0].device_kind.lower()
    except Exception:
        pass
    if "v5" in kind or "v6" in kind:
        # 128 MiB physical VMEM: ~28-30 MiB live with double buffering at
        # 512x1024 output tiles and a 2048-deep K stream.
        return 100 * 1024 * 1024, 512, 1024, 2048
    # v7x (64 MiB physical VMEM per TC) and unknown chips: conservative.
    return 48 * 1024 * 1024, 512, 512, 1024


# ---------------------------------------------------------------------------
# Small path: whole problem single-shot in VMEM (no grid, no pipeline).
# ---------------------------------------------------------------------------
def _linear_kernel_small(x_ref, wt_ref, b_ref, o_ref):
    acc = jnp.dot(x_ref[...], wt_ref[...], preferred_element_type=jnp.float32)
    o_ref[...] = (acc + b_ref[...]).astype(o_ref.dtype)


def _linear_small(x, wt, b2, out_dtype, vmem_limit):
    M = x.shape[0]
    N = wt.shape[1]
    return pl.pallas_call(
        _linear_kernel_small,
        out_shape=jax.ShapeDtypeStruct((M, N), out_dtype),
        in_specs=[pl.BlockSpec(memory_space=pltpu.MemorySpace.VMEM)] * 3,
        out_specs=pl.BlockSpec(memory_space=pltpu.MemorySpace.VMEM),
        compiler_params=pltpu.CompilerParams(vmem_limit_bytes=vmem_limit),
    )(x, wt, b2)


# ---------------------------------------------------------------------------
# Tiled path: (M, N, K) grid, reduction axis last, f32 accumulation.
# ---------------------------------------------------------------------------
def _tiled_kernel_f32_out(x_ref, wt_ref, b_ref, o_ref):
    # f32 output: accumulate directly into the resident output block
    # (same (i, j) for every k) -> no scratch, no finalize copy pass.
    k = pl.program_id(2)

    @pl.when(k == 0)
    def _():
        o_ref[...] = jnp.zeros_like(o_ref)

    o_ref[...] += jnp.dot(x_ref[...], wt_ref[...],
                          preferred_element_type=jnp.float32)

    @pl.when(k == pl.num_programs(2) - 1)
    def _():
        o_ref[...] = o_ref[...] + b_ref[...]


def _tiled_kernel_acc(x_ref, wt_ref, b_ref, o_ref, acc_ref):
    # Non-f32 output: f32 VMEM accumulator, cast only at finalize.
    k = pl.program_id(2)

    @pl.when(k == 0)
    def _():
        acc_ref[...] = jnp.zeros_like(acc_ref)

    acc_ref[...] += jnp.dot(x_ref[...], wt_ref[...],
                            preferred_element_type=jnp.float32)

    @pl.when(k == pl.num_programs(2) - 1)
    def _():
        o_ref[...] = (acc_ref[...] + b_ref[...]).astype(o_ref.dtype)


def _linear_tiled(x, wt, b2, out_dtype, *, tm, tn, tk, vmem_limit):
    M, K = x.shape
    N = wt.shape[1]

    # Never use tiles larger than the (128-aligned) problem dims.
    tm = min(tm, _round_up(M, 128))
    tn = min(tn, _round_up(N, 128))
    tk = min(tk, _round_up(K, 128))

    # v7x has 2 TensorCores sharded over the parallel grid axes: keep >= 2
    # parallel steps when the problem permits (no effect on single-TC chips).
    if pl.cdiv(M, tm) * pl.cdiv(N, tn) < 2:
        if N > 256 and tn > 256:
            tn = max(256, tn // 2)
        elif M > 256 and tm > 256:
            tm = max(256, tm // 2)

    # Zero-pad every dim to a tile multiple (zeros are neutral for matmul and
    # for the padded bias lanes); slice the result back afterwards.
    Mp, Kp, Np = _round_up(M, tm), _round_up(K, tk), _round_up(N, tn)
    if (Mp, Kp) != (M, K):
        x = jnp.pad(x, ((0, Mp - M), (0, Kp - K)))
    if (Kp, Np) != (K, N):
        wt = jnp.pad(wt, ((0, Kp - K), (0, Np - N)))
    if Np != N:
        b2 = jnp.pad(b2, ((0, 0), (0, Np - N)))

    grid = (Mp // tm, Np // tn, Kp // tk)
    f32_out = jnp.dtype(out_dtype) == jnp.dtype(jnp.float32)
    kernel = _tiled_kernel_f32_out if f32_out else _tiled_kernel_acc
    scratch = [] if f32_out else [pltpu.VMEM((tm, tn), jnp.float32)]

    out = pl.pallas_call(
        kernel,
        out_shape=jax.ShapeDtypeStruct((Mp, Np), out_dtype),
        grid_spec=pltpu.PrefetchScalarGridSpec(
            num_scalar_prefetch=0,
            grid=grid,
            in_specs=[
                pl.BlockSpec((tm, tk), lambda i, j, k: (i, k)),  # x
                pl.BlockSpec((tk, tn), lambda i, j, k: (k, j)),  # W^T (K, N), lane-dense in N
                pl.BlockSpec((1, tn), lambda i, j, k: (0, j)),   # bias (reused across k)
            ],
            out_specs=pl.BlockSpec((tm, tn), lambda i, j, k: (i, j)),
            scratch_shapes=scratch,
        ),
        compiler_params=pltpu.CompilerParams(
            dimension_semantics=("parallel", "parallel", "arbitrary"),
            vmem_limit_bytes=vmem_limit,
        ),
    )(x, wt, b2)

    if (Mp, Np) != (M, N):
        out = out[:M, :N]
    return out


def linear_forward(x, weight, bias, *, tm=None, tn=None, tk=None,
                   use_bf16_mxu=False, force_tiled=False):
    """torch.nn.Linear forward: x @ weight.T + bias.

    x: (B, in_features), weight: (out_features, in_features), bias: (out_features,).
    """
    vmem_limit, d_tm, d_tn, d_tk = _tpu_generation_config()
    tm = d_tm if tm is None else tm
    tn = d_tn if tn is None else tn
    tk = d_tk if tk is None else tk

    M, K = x.shape
    N = weight.shape[0]
    out_dtype = x.dtype

    # One-time (K, N) layout for the fixed nn.Linear weight: MXU RHS becomes
    # lane-dense in N and no per-K-step XLU transpose is needed in the kernel.
    wt = weight.T
    b2 = bias.reshape(1, N)

    if use_bf16_mxu:
        # Optional bf16 MXU feed with f32 accumulation (numerics-permitting):
        # 2-8x MXU rate and half the x/W HBM bytes.
        x = x.astype(jnp.bfloat16)
        wt = wt.astype(jnp.bfloat16)

    # Single-shot small path if everything fits comfortably (single-buffered)
    # within roughly half the scoped VMEM budget.
    resident_bytes = (x.size * x.dtype.itemsize
                      + wt.size * wt.dtype.itemsize
                      + b2.size * b2.dtype.itemsize
                      + M * N * jnp.dtype(out_dtype).itemsize)
    if not force_tiled and resident_bytes <= vmem_limit // 2:
        return _linear_small(x, wt, b2, out_dtype, vmem_limit)

    return _linear_tiled(x, wt, b2, out_dtype, tm=tm, tn=tn, tk=tk,
                         vmem_limit=vmem_limit)


if __name__ == "__main__":
    key = jax.random.PRNGKey(0)
    kx, kw, kb, kx2, kw2, kb2 = jax.random.split(key, 6)

    # --- Toy shapes matching the PyTorch module (batch=2, in=10, out=5). ---
    input_size, output_size, batch = 10, 5, 2
    bound = 1.0 / (input_size ** 0.5)
    weight = jax.random.uniform(kw, (output_size, input_size), jnp.float32, -bound, bound)
    bias = jax.random.uniform(kb, (output_size,), jnp.float32, -bound, bound)
    x = jax.random.normal(kx, (batch, input_size), jnp.float32)

    out = jax.block_until_ready(linear_forward(x, weight, bias))
    ref = x @ weight.T + bias
    assert out.shape == (batch, output_size)
    assert jnp.allclose(out, ref, atol=1e-5, rtol=1e-5)

    # --- Exercise the tiled path (multi-step grid + padding) at a quick size. ---
    M2, K2, N2 = 256, 384, 192   # N2 not a 128-multiple -> exercises padding.
    bound2 = 1.0 / (K2 ** 0.5)
    weight2 = jax.random.uniform(kw2, (N2, K2), jnp.float32, -bound2, bound2)
    bias2 = jax.random.uniform(kb2, (N2,), jnp.float32, -bound2, bound2)
    x2 = jax.random.normal(kx2, (M2, K2), jnp.float32)

    out2 = jax.block_until_ready(
        linear_forward(x2, weight2, bias2, tm=128, tn=128, tk=128, force_tiled=True))
    ref2 = x2 @ weight2.T + bias2
    assert out2.shape == (M2, N2)
    assert jnp.allclose(out2, ref2, atol=2e-3, rtol=2e-3)

    print("KERNEL_OK")
</pallas_src>

<mosaic_0001>
module attributes {stable_mosaic.version = 11 : i64} {
  func.func @_linear_kernel_small(%arg0: memref<2x10xf32, #tpu.memory_space<vmem>>, %arg1: memref<10x5xf32, #tpu.memory_space<vmem>>, %arg2: memref<1x5xf32, #tpu.memory_space<vmem>>, %arg3: memref<2x5xf32, #tpu.memory_space<vmem>>) attributes {dimension_semantics = [], scalar_prefetch = 0 : i64, scratch_operands = 0 : i64, tpu.core_type = #tpu.core_type<tc>} {
    %c0 = arith.constant 0 : index
    %c0_0 = arith.constant 0 : index
    %0 = vector.load %arg0[%c0, %c0_0] : memref<2x10xf32, #tpu.memory_space<vmem>>, vector<2x10xf32>
    %c0_1 = arith.constant 0 : index
    %c0_2 = arith.constant 0 : index
    %1 = vector.load %arg1[%c0_1, %c0_2] : memref<10x5xf32, #tpu.memory_space<vmem>>, vector<10x5xf32>
    %cst = arith.constant dense<0.000000e+00> : vector<2x5xf32>
    %2 = tpu.matmul %0, %1, %cst {dimension_numbers = #tpu.dot_dimension_numbers<[1], [0], [0], [1], [0, 0, 1, 1], [], []>} : vector<2x10xf32>, vector<10x5xf32>, vector<2x5xf32> -> vector<2x5xf32>
    %c0_3 = arith.constant 0 : index
    %c0_4 = arith.constant 0 : index
    %3 = vector.load %arg2[%c0_3, %c0_4] : memref<1x5xf32, #tpu.memory_space<vmem>>, vector<1x5xf32>
    %4 = vector.broadcast %3 : vector<1x5xf32> to vector<2x5xf32>
    %5 = arith.addf %2, %4 : vector<2x5xf32>
    %c0_5 = arith.constant 0 : index
    %c0_6 = arith.constant 0 : index
    %6 = vector.load %arg3[%c0_5, %c0_6] : memref<2x5xf32, #tpu.memory_space<vmem>>, vector<2x5xf32>
    tpu.vector_store %arg3[%c0_5, %c0_6], %5 {strides = array<i32>} : memref<2x5xf32, #tpu.memory_space<vmem>>, vector<2x5xf32>,
    return
  }
}

</mosaic_0001>

<llo_original>
// kernel: tpu_custom_call.1
$region0: #{tpu_custom_call.1}
  #allocation0 [shape = 'u32[]', space=smem, size = 0x4, offset = 0x4, fixed_abs, tag = 'smem constant byte address 0x4 - core index']
  #allocation1 [shape = 'u32[144,128]{1,0:T(1,128)}', space=vmem, size = 0x12000, scoped, tag = 'internal scratch']
  %s0 = inlined_call_operand.vmem [shape: f32[2,10], index: 0, kind: input, shape index: {}]
  %s1 = inlined_call_operand.vmem [shape: f32[10,5], index: 1, kind: input, shape index: {}]
  %s2 = inlined_call_operand.vmem [shape: f32[1,5], index: 2, kind: input, shape index: {}]
  %s3 = inlined_call_operand.hbm [shape: f32[2,5], index: 3, kind: output, shape index: {}]
  %s4 = sld [smem:[#allocation0]]
  $region22: #{tpu_custom_call.1} parent=0
    _
  %s6 = ssub.s32 1, %s4
  %s7 = scalar_select 0, %s6, %s4
  $region1: #{tpu_custom_call.1} parent=0
    #allocation2 [shape = 'u8[1024]{0}', space=vmem, size = 0x400, scoped, tag = 'output window, operand 0, single buffered']
    #allocation3 [shape = 's32[1]{0}', space=sflag, size = 0x4, scoped, tag = 'scoped memory for tpu_custom_call.1']
    %8 = vsyncpa [#allocation3], 0
    // Predicated region
    $region2: #{tpu_custom_call.1} parent=1 // pred_check
      _
    $region3: #{tpu_custom_call.1} parent=1 // pred_check_branch
      %10 = sbr.rel (0) target = $region5
    $region4: #{tpu_custom_call.1} parent=1 // pred_region
      _
    $region5: #{tpu_custom_call.1} parent=1 // pred_fallthru
      _
    // Predicated region
    $region6: #{tpu_custom_call.1} parent=1 // pred_check
      _
    $region7: #{tpu_custom_call.1} parent=1 // pred_check_branch
      %12 = sbr.rel (0) target = $region9
    $region8: #{tpu_custom_call.1} parent=1 // pred_region
      _
    $region9: #{tpu_custom_call.1} parent=1 // pred_fallthru
      _
    // Predicated region
    $region10: #{tpu_custom_call.1} parent=1 // pred_check
      _
    $region11: #{tpu_custom_call.1} parent=1 // pred_check_branch
      %14 = sbr.rel (0) target = $region13
    $region12: #{tpu_custom_call.1} parent=1 // pred_region
      _
    $region13: #{tpu_custom_call.1} parent=1 // pred_fallthru
      _
    %v15 = vld [vmem:[%s0] sm:$0x3]
    %v16 = vld [vmem:[%s1] sm:$0xff]
    %v17 = vld [vmem:[%s1 + $0x8] sm:$0x3]
    %v18 = vld [vmem:[%s2] sm:$0x1]
    %v20 = vlaneseq
    %v21 = vshrl.u32 %v20, 7
    %v22 = vsub.s32 0, %v21
    %v23 = vrot.slane %v18, %v22
    %vm25 = vcmask 80896
    %v27 = vsel %vm25, %v15, 0
    %vm29 = vcmask 1041408
    %v31 = vsel %vm29, %v17, 0
    %33 = vmatprep.subr.mxu0 0.0
    %34 = vmatpush1.msra.mxu0 0.0
    %35 = vmatprep.subr.mxu0 0.0
    %36 = vmatpush1.msra.mxu0 0.0
    %37 = vmatprep.subr.mxu0 0.0
    %38 = vmatpush1.msra.mxu0 0.0
    %39 = vmatprep.subr.mxu0 0.0
    %40 = vmatpush1.msra.mxu0 0.0
    %41 = vmatprep.subr.mxu0 0.0
    %42 = vmatpush1.msra.mxu0 0.0
    %43 = vmatprep.subr.mxu0 0.0
    %44 = vmatpush1.msra.mxu0 0.0
    %45 = vmatprep.subr.mxu0 0.0
    %46 = vmatpush1.msra.mxu0 0.0
    %47 = vmatprep.subr.mxu0 0.0
    %48 = vmatpush1.msra.mxu0 0.0
    %49 = vmatprep.subr.mxu0 0.0
    %50 = vmatpush1.msra.mxu0 0.0
    %51 = vmatprep.subr.mxu0 0.0
    %52 = vmatpush1.msra.mxu0 0.0
    %53 = vmatprep.subr.mxu0 0.0
    %54 = vmatpush1.msra.mxu0 0.0
    %55 = vmatprep.subr.mxu0 0.0
    %56 = vmatpush1.msra.mxu0 0.0
    %57 = vmatprep.subr.mxu0 0.0
    %58 = vmatpush1.msra.mxu0 0.0
    %59 = vmatprep.subr.mxu0 0.0
    %60 = vmatpush1.msra.mxu0 0.0
    %61 = vmatprep.subr.mxu0 0.0
    %62 = vmatpush1.msra.mxu0 %v31
    %63 = vmatprep.subr.mxu0 0.0
    %64 = vmatpush1.msra.mxu0 %v16
    %65 = vmatprep.subr.mxu0 0.0
    %66 = vmatpush2.msra.mxu0 0.0
    %67 = vmatprep.subr.mxu0 0.0
    %68 = vmatpush2.msra.mxu0 0.0
    %69 = vmatprep.subr.mxu0 0.0
    %70 = vmatpush2.msra.mxu0 0.0
    %71 = vmatprep.subr.mxu0 0.0
    %72 = vmatpush2.msra.mxu0 0.0
    %73 = vmatprep.subr.mxu0 0.0
    %74 = vmatpush2.msra.mxu0 0.0
    %75 = vmatprep.subr.mxu0 0.0
    %76 = vmatpush2.msra.mxu0 0.0
    %77 = vmatprep.subr.mxu0 0.0
    %78 = vmatpush2.msra.mxu0 0.0
    %79 = vmatprep.subr.mxu0 0.0
    %80 = vmatpush2.msra.mxu0 0.0
    %81 = vmatprep.subr.mxu0 0.0
    %82 = vmatpush2.msra.mxu0 0.0
    %83 = vmatprep.subr.mxu0 0.0
    %84 = vmatpush2.msra.mxu0 0.0
    %85 = vmatprep.subr.mxu0 0.0
    %86 = vmatpush2.msra.mxu0 0.0
    %87 = vmatprep.subr.mxu0 0.0
    %88 = vmatpush2.msra.mxu0 0.0
    %89 = vmatprep.subr.mxu0 0.0
    %90 = vmatpush2.msra.mxu0 0.0
    %91 = vmatprep.subr.mxu0 0.0
    %92 = vmatpush2.msra.mxu0 0.0
    %93 = vmatprep.subr.mxu0 0.0
    %94 = vmatpush2.msra.mxu0 0.0
    %95 = vmatprep.subr.mxu0 0.0
    %96 = vmatpush2.msra.mxu0 0.0
    %97 = vmatprep.mubr.f32.mxu0 0.0
    %98 = vmatmul.mubr.f32.gmra.mxu0 %v27
    %v99 = vpop.f32.mrf.mxu0
    %v100 = vadd.f32 %v23, %v99
    %v101 = vpop.f32.mrf.mxu0
    %102 = vdwg.mxu0
    %vm103 = vcmask 33792
    %104 = vst.msk [vmem:[#allocation2] sm:$0x3] %vm103, %v100
    // Predicated region
    $region14: #{tpu_custom_call.1} parent=1 // pred_check
      _
    $region15: #{tpu_custom_call.1} parent=1 // pred_check_branch
      %106 = sbr.rel (0) target = $region17
    $region16: #{tpu_custom_call.1} parent=1 // pred_region
      %s108 = ssub.s32 32, 32
      %109 = vsyncadd [#allocation3], %s108
      %s111 = sshll.u32 [#allocation2], 4
      %s112 = int_to_ptr.vmem [resolvable:$true] %s111
      %114 = dma.vmem_to_hbm [thread:$0]  %s112, 32, %s3, [#allocation3]
    $region17: #{tpu_custom_call.1} parent=1 // pred_fallthru
      _
    // Predicated region
    $region18: #{tpu_custom_call.1} parent=1 // pred_check
      _
    $region19: #{tpu_custom_call.1} parent=1 // pred_check_branch
      %116 = sbr.rel (0) target = $region21
    $region20: #{tpu_custom_call.1} parent=1 // pred_region
      %117 = dma.done [#allocation3], 32
    $region21: #{tpu_custom_call.1} parent=1 // pred_fallthru
      _
    %118 = vsyncpa [#allocation3], 1

</llo_original>
